<compile_context>
chip_gen: v6e
topology: v6e:2x2x1
jax: 0.10.0
libtpu: 0.0.40
codegen_flags: <defaults>
</compile_context>

<pallas_src>
import jax
import jax.numpy as jnp
from jax.experimental import pallas as pl
from jax.experimental.pallas import tpu as pltpu

LN_EPS = 1e-5  # torch.nn.LayerNorm default


def _round_up(x, m):
    return (x + m - 1) // m * m


def _critic_kernel(x_ref, w1_ref, b1_ref, w2_ref, vec2_ref, out_ref):
    """One batch-tile of the Critic forward pass, all in VMEM.

    vec2_ref packs (row 0) bias of layer 2 (with LN1 beta folded in),
             (row 1) final-layer weight row (with LN2 gamma folded in),
             (row 2) [final bias (with LN2 beta folded in), sum(row 1), 0...].
    """
    x = x_ref[...]                      # keep input dtype (bf16 OK) for the MXU

    # ---- layer 1: Linear -> ReLU -> LayerNorm (affine folded into layer 2) --
    h = jnp.dot(x, w1_ref[...], preferred_element_type=jnp.float32) + b1_ref[...]
    h = jnp.maximum(h, 0.0)
    mu = jnp.mean(h, axis=-1, keepdims=True)
    ms = jnp.mean(h * h, axis=-1, keepdims=True)           # one-pass stats
    var = jnp.maximum(ms - mu * mu, 0.0)
    h = (h - mu) * jax.lax.rsqrt(var + LN_EPS)

    # ---- layer 2: Linear -> ReLU; LN2 normalization folded into the head ----
    h = h.astype(w2_ref.dtype)          # bf16 operands into the MXU if supplied
    h = jnp.dot(h, w2_ref[...], preferred_element_type=jnp.float32) + vec2_ref[0:1, :]
    h = jnp.maximum(h, 0.0)
    mu = jnp.mean(h, axis=-1, keepdims=True)
    ms = jnp.mean(h * h, axis=-1, keepdims=True)
    var = jnp.maximum(ms - mu * mu, 0.0)
    inv = jax.lax.rsqrt(var + LN_EPS)

    # ---- head: Linear(h2, 1) as VPU multiply + lane reduction, with the
    #      normalization applied to the scalar instead of the full activation:
    #      v = inv * (sum(h*w) - mu*sum(w)) + b
    s = jnp.sum(h * vec2_ref[1:2, :], axis=-1, keepdims=True)
    v = inv * (s - mu * vec2_ref[2:3, 1:2]) + vec2_ref[2:3, 0:1]
    out_ref[...] = v.astype(out_ref.dtype)


def _invariant_spec(shape):
    n = len(shape)
    return pl.BlockSpec(shape, lambda *_: (0,) * n)


def critic_forward(cen_obs, params, rnn_state=None, mask=None, *, batch_tile=None):
    """Pallas wrapper. rnn_state / mask are unused (non-recurrent critic)."""
    del rnn_state, mask  # accepted for API parity; never used by the forward
    B, obs_dim = cen_obs.shape
    w1, b1, g1, be1, w2, b2, g2, be2, wl, bl = params
    h1 = w1.shape[1]
    h2 = w2.shape[1]
    assert h2 >= 2, "hidden_dims[-1] must be >= 2 (vec2 packing)"

    # ---- fold LayerNorm affines into the following linear layers (f32 math) -
    f32 = jnp.float32
    w1f = w1.astype(f32)
    b1f = b1.astype(f32).reshape(1, h1)
    w2f = g1.astype(f32).reshape(h1, 1) * w2.astype(f32)              # (h1, h2)
    b2f = b2.astype(f32).reshape(1, h2) + be1.astype(f32).reshape(1, h1) @ w2.astype(f32)
    wlr = (g2.astype(f32).reshape(h2, 1) * wl.astype(f32)).reshape(1, h2)
    blf = bl.astype(f32).reshape(1, 1) + be2.astype(f32).reshape(1, h2) @ wl.astype(f32)
    swl = jnp.sum(wlr, axis=-1, keepdims=True)                        # (1, 1)
    # pack (b2f, wl_row, [bl, sum(wl_row), 0...]) into one (3, h2) array
    row2 = jnp.concatenate([blf, swl, jnp.zeros((1, h2 - 2), f32)], axis=1)
    vec2 = jnp.concatenate([b2f, wlr, row2], axis=0)

    # MXU operands follow the observation dtype (bf16 in -> bf16 matmuls).
    mxu_dtype = cen_obs.dtype
    w1k = w1f.astype(mxu_dtype)
    w2k = w2f.astype(mxu_dtype)

    # ---- batch tiling: fill the MXU rows, pad ragged batches ----------------
    if batch_tile is None:
        batch_tile = max(8, min(512, _round_up(B, 8)))
    batch_tile = _round_up(int(batch_tile), 8)
    Bp = _round_up(B, batch_tile)
    x = cen_obs if Bp == B else jnp.pad(cen_obs, ((0, Bp - B), (0, 0)))
    num_tiles = Bp // batch_tile

    grid_spec = pltpu.PrefetchScalarGridSpec(
        num_scalar_prefetch=0,
        grid=(num_tiles,),
        in_specs=[
            pl.BlockSpec((batch_tile, obs_dim), lambda i: (i, 0)),  # obs tile
            _invariant_spec(w1k.shape),
            _invariant_spec(b1f.shape),
            _invariant_spec(w2k.shape),
            _invariant_spec(vec2.shape),
        ],
        out_specs=pl.BlockSpec((batch_tile, 1), lambda i: (i, 0)),
    )
    # NOTE: at these sizes the default VMEM budget is ample; when scaling
    # hidden_dims / batch_tile up (esp. v7x's 64 MiB VMEM), set
    # pltpu.CompilerParams(vmem_limit_bytes=...) and consider
    # pipeline_mode=pl.Buffered(1) on the grid-invariant weight specs.
    out = pl.pallas_call(
        _critic_kernel,
        out_shape=jax.ShapeDtypeStruct((Bp, 1), jnp.float32),
        grid_spec=grid_spec,
        compiler_params=pltpu.CompilerParams(
            dimension_semantics=("parallel",)),
    )(x, w1k, b1f, w2k, vec2)
    return out[:B]


def critic_reference(cen_obs, params):
    """Pure-JAX reference of the same forward (unfolded params)."""
    w1, b1, g1, be1, w2, b2, g2, be2, wl, bl = params

    def ln(h, g, be):
        mu = jnp.mean(h, axis=-1, keepdims=True)
        var = jnp.mean((h - mu) ** 2, axis=-1, keepdims=True)
        return (h - mu) / jnp.sqrt(var + LN_EPS) * g + be

    h = ln(jnp.maximum(cen_obs @ w1 + b1, 0.0), g1, be1)
    h = ln(jnp.maximum(h @ w2 + b2, 0.0), g2, be2)
    return h @ wl + bl


def init_params(key, obs_dim, hidden_dims):
    """Deterministic synthetic init (stand-in for orthogonal init)."""
    ks = jax.random.split(key, 3)
    h1, h2 = hidden_dims
    w1 = jax.random.normal(ks[0], (obs_dim, h1), jnp.float32) * 0.1
    b1 = jnp.zeros((1, h1), jnp.float32)
    g1 = jnp.ones((1, h1), jnp.float32) + 0.05
    be1 = jnp.full((1, h1), 0.01, jnp.float32)
    w2 = jax.random.normal(ks[1], (h1, h2), jnp.float32) * 0.1
    b2 = jnp.zeros((1, h2), jnp.float32)
    g2 = jnp.ones((1, h2), jnp.float32) - 0.03
    be2 = jnp.full((1, h2), -0.02, jnp.float32)
    wl = jax.random.normal(ks[2], (h2, 1), jnp.float32) * 0.1
    bl = jnp.zeros((1, 1), jnp.float32)
    return (w1, b1, g1, be1, w2, b2, g2, be2, wl, bl)


if __name__ == "__main__":
    key = jax.random.PRNGKey(0)
    k_obs, k_par = jax.random.split(key)

    B, obs_dim = 16, 16
    hidden_dims = (32, 32)

    cen_obs = jax.random.normal(k_obs, (B, obs_dim), jnp.float32)
    rnn_state = None                      # non-recurrent critic: unused
    mask = jnp.ones((B, 1), jnp.float32)  # unused by the forward pass
    params = init_params(k_par, obs_dim, hidden_dims)

    value = critic_forward(cen_obs, params, rnn_state, mask)
    value = jax.block_until_ready(value)
    ref = critic_reference(cen_obs, params)
    assert value.shape == (B, 1)
    assert jnp.allclose(value, ref, atol=1e-4, rtol=1e-4)

    # Ragged batch exercises the padding path (no divisibility requirement).
    B2 = 13
    obs2 = jax.random.normal(jax.random.PRNGKey(1), (B2, obs_dim), jnp.float32)
    v2 = jax.block_until_ready(critic_forward(obs2, params))
    r2 = critic_reference(obs2, params)
    assert v2.shape == (B2, 1)
    assert jnp.allclose(v2, r2, atol=1e-4, rtol=1e-4)

    print("KERNEL_OK")
</pallas_src>

<mosaic_0001>
module attributes {stable_mosaic.version = 11 : i64} {
  func.func @_critic_kernel(%arg0: i32, %arg1: memref<16x16xf32, #tpu.memory_space<vmem>>, %arg2: memref<16x32xf32, #tpu.memory_space<vmem>>, %arg3: memref<1x32xf32, #tpu.memory_space<vmem>>, %arg4: memref<32x32xf32, #tpu.memory_space<vmem>>, %arg5: memref<3x32xf32, #tpu.memory_space<vmem>>, %arg6: memref<16x1xf32, #tpu.memory_space<vmem>>) attributes {dimension_semantics = [#tpu.dimension_semantics<parallel>], iteration_bounds = array<i64: 1>, scalar_prefetch = 0 : i64, scratch_operands = 0 : i64, tpu.core_type = #tpu.core_type<tc>, window_params = [{transform_indices = @transform_0, window_bounds = array<i64: 16, 16>}, {pipeline_mode = #tpu.pipeline_mode<synchronous>, transform_indices = @transform_1, window_bounds = array<i64: 16, 32>}, {pipeline_mode = #tpu.pipeline_mode<synchronous>, transform_indices = @transform_2, window_bounds = array<i64: 1, 32>}, {pipeline_mode = #tpu.pipeline_mode<synchronous>, transform_indices = @transform_3, window_bounds = array<i64: 32, 32>}, {pipeline_mode = #tpu.pipeline_mode<synchronous>, transform_indices = @transform_4, window_bounds = array<i64: 3, 32>}, {transform_indices = @transform_5, window_bounds = array<i64: 16, 1>}]} {
    %c0 = arith.constant 0 : index
    %c0_0 = arith.constant 0 : index
    %0 = vector.load %arg1[%c0, %c0_0] : memref<16x16xf32, #tpu.memory_space<vmem>>, vector<16x16xf32>
    %c0_1 = arith.constant 0 : index
    %c0_2 = arith.constant 0 : index
    %1 = vector.load %arg2[%c0_1, %c0_2] : memref<16x32xf32, #tpu.memory_space<vmem>>, vector<16x32xf32>
    %cst = arith.constant dense<0.000000e+00> : vector<16x32xf32>
    %2 = tpu.matmul %0, %1, %cst {dimension_numbers = #tpu.dot_dimension_numbers<[1], [0], [0], [1], [0, 0, 1, 1], [], []>} : vector<16x16xf32>, vector<16x32xf32>, vector<16x32xf32> -> vector<16x32xf32>
    %c0_3 = arith.constant 0 : index
    %c0_4 = arith.constant 0 : index
    %3 = vector.load %arg3[%c0_3, %c0_4] : memref<1x32xf32, #tpu.memory_space<vmem>>, vector<1x32xf32>
    %4 = vector.broadcast %3 : vector<1x32xf32> to vector<16x32xf32>
    %5 = arith.addf %2, %4 : vector<16x32xf32>
    %cst_5 = arith.constant 0.000000e+00 : f32
    %6 = vector.broadcast %cst_5 : f32 to vector<16x32xf32>
    %7 = arith.maximumf %5, %6 : vector<16x32xf32>
    %cst_6 = arith.constant dense<0.000000e+00> : vector<16xf32>
    %8 = vector.multi_reduction <add>, %7, %cst_6 [1] : vector<16x32xf32> to vector<16xf32>
    %9 = vector.shape_cast %8 : vector<16xf32> to vector<16x1xf32>
    %cst_7 = arith.constant 3.200000e+01 : f32
    %10 = vector.broadcast %cst_7 : f32 to vector<16x1xf32>
    %11 = arith.divf %9, %10 : vector<16x1xf32>
    %12 = arith.mulf %7, %7 : vector<16x32xf32>
    %cst_8 = arith.constant dense<0.000000e+00> : vector<16xf32>
    %13 = vector.multi_reduction <add>, %12, %cst_8 [1] : vector<16x32xf32> to vector<16xf32>
    %14 = vector.shape_cast %13 : vector<16xf32> to vector<16x1xf32>
    %cst_9 = arith.constant 3.200000e+01 : f32
    %15 = vector.broadcast %cst_9 : f32 to vector<16x1xf32>
    %16 = arith.divf %14, %15 : vector<16x1xf32>
    %17 = arith.mulf %11, %11 : vector<16x1xf32>
    %18 = arith.subf %16, %17 : vector<16x1xf32>
    %cst_10 = arith.constant 0.000000e+00 : f32
    %19 = vector.broadcast %cst_10 : f32 to vector<16x1xf32>
    %20 = arith.maximumf %18, %19 : vector<16x1xf32>
    %21 = vector.broadcast %11 : vector<16x1xf32> to vector<16x32xf32>
    %22 = arith.subf %7, %21 : vector<16x32xf32>
    %cst_11 = arith.constant 9.99999974E-6 : f32
    %23 = vector.broadcast %cst_11 : f32 to vector<16x1xf32>
    %24 = arith.addf %20, %23 : vector<16x1xf32>
    %25 = math.rsqrt %24 : vector<16x1xf32>
    %26 = vector.broadcast %25 : vector<16x1xf32> to vector<16x32xf32>
    %27 = arith.mulf %22, %26 : vector<16x32xf32>
    %c0_12 = arith.constant 0 : index
    %c0_13 = arith.constant 0 : index
    %28 = vector.load %arg4[%c0_12, %c0_13] : memref<32x32xf32, #tpu.memory_space<vmem>>, vector<32x32xf32>
    %cst_14 = arith.constant dense<0.000000e+00> : vector<16x32xf32>
    %29 = tpu.matmul %27, %28, %cst_14 {dimension_numbers = #tpu.dot_dimension_numbers<[1], [0], [0], [1], [0, 0, 1, 1], [], []>} : vector<16x32xf32>, vector<32x32xf32>, vector<16x32xf32> -> vector<16x32xf32>
    %c0_15 = arith.constant 0 : index
    %c0_16 = arith.constant 0 : index
    %30 = vector.load %arg5[%c0_15, %c0_16] : memref<3x32xf32, #tpu.memory_space<vmem>>, vector<1x32xf32>
    %31 = vector.broadcast %30 : vector<1x32xf32> to vector<16x32xf32>
    %32 = arith.addf %29, %31 : vector<16x32xf32>
    %cst_17 = arith.constant 0.000000e+00 : f32
    %33 = vector.broadcast %cst_17 : f32 to vector<16x32xf32>
    %34 = arith.maximumf %32, %33 : vector<16x32xf32>
    %cst_18 = arith.constant dense<0.000000e+00> : vector<16xf32>
    %35 = vector.multi_reduction <add>, %34, %cst_18 [1] : vector<16x32xf32> to vector<16xf32>
    %36 = vector.shape_cast %35 : vector<16xf32> to vector<16x1xf32>
    %cst_19 = arith.constant 3.200000e+01 : f32
    %37 = vector.broadcast %cst_19 : f32 to vector<16x1xf32>
    %38 = arith.divf %36, %37 : vector<16x1xf32>
    %39 = arith.mulf %34, %34 : vector<16x32xf32>
    %cst_20 = arith.constant dense<0.000000e+00> : vector<16xf32>
    %40 = vector.multi_reduction <add>, %39, %cst_20 [1] : vector<16x32xf32> to vector<16xf32>
    %41 = vector.shape_cast %40 : vector<16xf32> to vector<16x1xf32>
    %cst_21 = arith.constant 3.200000e+01 : f32
    %42 = vector.broadcast %cst_21 : f32 to vector<16x1xf32>
    %43 = arith.divf %41, %42 : vector<16x1xf32>
    %44 = arith.mulf %38, %38 : vector<16x1xf32>
    %45 = arith.subf %43, %44 : vector<16x1xf32>
    %cst_22 = arith.constant 0.000000e+00 : f32
    %46 = vector.broadcast %cst_22 : f32 to vector<16x1xf32>
    %47 = arith.maximumf %45, %46 : vector<16x1xf32>
    %cst_23 = arith.constant 9.99999974E-6 : f32
    %48 = vector.broadcast %cst_23 : f32 to vector<16x1xf32>
    %49 = arith.addf %47, %48 : vector<16x1xf32>
    %50 = math.rsqrt %49 : vector<16x1xf32>
    %c1 = arith.constant 1 : index
    %c0_24 = arith.constant 0 : index
    %51 = vector.load %arg5[%c1, %c0_24] : memref<3x32xf32, #tpu.memory_space<vmem>>, vector<1x32xf32>
    %52 = vector.broadcast %51 : vector<1x32xf32> to vector<16x32xf32>
    %53 = arith.mulf %34, %52 : vector<16x32xf32>
    %cst_25 = arith.constant dense<0.000000e+00> : vector<16xf32>
    %54 = vector.multi_reduction <add>, %53, %cst_25 [1] : vector<16x32xf32> to vector<16xf32>
    %55 = vector.shape_cast %54 : vector<16xf32> to vector<16x1xf32>
    %c2 = arith.constant 2 : index
    %c1_26 = arith.constant 1 : index
    %56 = vector.load %arg5[%c2, %c1_26] : memref<3x32xf32, #tpu.memory_space<vmem>>, vector<1x1xf32>
    %57 = vector.broadcast %56 : vector<1x1xf32> to vector<16x1xf32>
    %58 = arith.mulf %38, %57 : vector<16x1xf32>
    %59 = arith.subf %55, %58 : vector<16x1xf32>
    %60 = arith.mulf %50, %59 : vector<16x1xf32>
    %c2_27 = arith.constant 2 : index
    %c0_28 = arith.constant 0 : index
    %61 = vector.load %arg5[%c2_27, %c0_28] : memref<3x32xf32, #tpu.memory_space<vmem>>, vector<1x1xf32>
    %62 = vector.broadcast %61 : vector<1x1xf32> to vector<16x1xf32>
    %63 = arith.addf %60, %62 : vector<16x1xf32>
    %c0_29 = arith.constant 0 : index
    %c0_30 = arith.constant 0 : index
    %64 = vector.load %arg6[%c0_29, %c0_30] : memref<16x1xf32, #tpu.memory_space<vmem>>, vector<16x1xf32>
    tpu.vector_store %arg6[%c0_29, %c0_30], %63 {strides = array<i32>} : memref<16x1xf32, #tpu.memory_space<vmem>>, vector<16x1xf32>,
    return
  }
  func.func @transform_0(%arg0: i32) -> (i32, i32) {
    %c0_i32 = arith.constant 0 : i32
    %c0_i32_0 = arith.constant 0 : i32
    return %arg0, %c0_i32 : i32, i32
  }
  func.func @transform_1(%arg0: i32) -> (i32, i32) {
    %c0_i32 = arith.constant 0 : i32
    %c0_i32_0 = arith.constant 0 : i32
    %c0_i32_1 = arith.constant 0 : i32
    return %c0_i32, %c0_i32_0 : i32, i32
  }
  func.func @transform_2(%arg0: i32) -> (i32, i32) {
    %c0_i32 = arith.constant 0 : i32
    %c0_i32_0 = arith.constant 0 : i32
    %c0_i32_1 = arith.constant 0 : i32
    return %c0_i32, %c0_i32_0 : i32, i32
  }
  func.func @transform_3(%arg0: i32) -> (i32, i32) {
    %c0_i32 = arith.constant 0 : i32
    %c0_i32_0 = arith.constant 0 : i32
    %c0_i32_1 = arith.constant 0 : i32
    return %c0_i32, %c0_i32_0 : i32, i32
  }
  func.func @transform_4(%arg0: i32) -> (i32, i32) {
    %c0_i32 = arith.constant 0 : i32
    %c0_i32_0 = arith.constant 0 : i32
    %c0_i32_1 = arith.constant 0 : i32
    return %c0_i32, %c0_i32_0 : i32, i32
  }
  func.func @transform_5(%arg0: i32) -> (i32, i32) {
    %c0_i32 = arith.constant 0 : i32
    %c0_i32_0 = arith.constant 0 : i32
    return %arg0, %c0_i32 : i32, i32
  }
}

</mosaic_0001>

<llo_original>
// kernel: tpu_custom_call.1
$region0: #{tpu_custom_call.1}
  #allocation0 [shape = 'u32[]', space=smem, size = 0x4, offset = 0x4, fixed_abs, tag = 'smem constant byte address 0x4 - core index']
  #allocation1 [shape = 'u32[144,128]{1,0:T(1,128)}', space=vmem, size = 0x12000, scoped, tag = 'internal scratch']
  %s0 = inlined_call_operand.hbm [shape: f32[16,16], index: 0, kind: input, shape index: {}]
  %s1 = inlined_call_operand.hbm [shape: f32[16,32], index: 1, kind: input, shape index: {}]
  %s2 = inlined_call_operand.vmem [shape: f32[1,32], index: 2, kind: input, shape index: {}]
  %s3 = inlined_call_operand.hbm [shape: f32[32,32], index: 3, kind: input, shape index: {}]
  %s4 = inlined_call_operand.vmem [shape: f32[3,32], index: 4, kind: input, shape index: {}]
  %s5 = inlined_call_operand.vmem [shape: f32[16,1], index: 5, kind: output, shape index: {}]
  %s6 = sld [smem:[#allocation0]]
  $region42: #{tpu_custom_call.1} parent=0
    _
  %s8 = ssub.s32 1, %s6
  %s9 = scalar_select 0, %s8, %s6
  $region1: #{tpu_custom_call.1} parent=0
    #allocation2 [shape = 'u8[8192]{0}', space=vmem, size = 0x2000, scoped, tag = 'input window, operand 0, single buffered']
    #allocation3 [shape = 's32[1]{0}', space=sflag, size = 0x4, scoped, tag = 'scoped memory for tpu_custom_call.1']
    #allocation4 [shape = 'u8[8192]{0}', space=vmem, size = 0x2000, scoped, tag = 'input window, operand 1, single buffered']
    #allocation5 [shape = 's32[1]{0}', space=sflag, size = 0x4, scoped, tag = 'scoped memory for tpu_custom_call.1']
    #allocation6 [shape = 'u8[16384]{0}', space=vmem, size = 0x4000, scoped, tag = 'input window, operand 3, single buffered']
    %10 = vsyncpa [#allocation3], 0
    %11 = vsyncpa [#allocation5], 0
    // Predicated region
    $region2: #{tpu_custom_call.1} parent=1 // pred_check
      _
    $region3: #{tpu_custom_call.1} parent=1 // pred_check_branch
      %13 = sbr.rel (0) target = $region5
    $region4: #{tpu_custom_call.1} parent=1 // pred_region
      %s15 = ssub.s32 256, 256
      %16 = vsyncadd [#allocation3], %s15
      %s17 = sshll.u32 [#allocation2], 4
      %s18 = int_to_ptr.vmem [resolvable:$true] %s17
      %23 = dma.hbm_to_vmem [thread:$0]  %s0, 256, %s18, [#allocation3], 128, 128, 8
    $region5: #{tpu_custom_call.1} parent=1 // pred_fallthru
      _
    // Predicated region
    $region6: #{tpu_custom_call.1} parent=1 // pred_check
      _
    $region7: #{tpu_custom_call.1} parent=1 // pred_check_branch
      %25 = sbr.rel (0) target = $region9
    $region8: #{tpu_custom_call.1} parent=1 // pred_region
      %s27 = ssub.s32 256, 256
      %28 = vsyncadd [#allocation5], %s27
      %s29 = sshll.u32 [#allocation4], 4
      %s30 = int_to_ptr.vmem [resolvable:$true] %s29
      %35 = dma.hbm_to_vmem [thread:$0]  %s1, 256, %s30, [#allocation5], 128, 128, 8
    $region9: #{tpu_custom_call.1} parent=1 // pred_fallthru
      _
    // Predicated region
    $region10: #{tpu_custom_call.1} parent=1 // pred_check
      _
    $region11: #{tpu_custom_call.1} parent=1 // pred_check_branch
      %37 = sbr.rel (0) target = $region13
    $region12: #{tpu_custom_call.1} parent=1 // pred_region
      _
    $region13: #{tpu_custom_call.1} parent=1 // pred_fallthru
      _
    // Predicated region
    $region14: #{tpu_custom_call.1} parent=1 // pred_check
      _
    $region15: #{tpu_custom_call.1} parent=1 // pred_check_branch
      %39 = sbr.rel (0) target = $region17
    $region16: #{tpu_custom_call.1} parent=1 // pred_region
      %s41 = ssub.s32 512, 512
      %42 = vsyncadd [#allocation5], %s41
      %s43 = sshll.u32 [#allocation6], 4
      %s44 = int_to_ptr.vmem [resolvable:$true] %s43
      %49 = dma.hbm_to_vmem [thread:$0]  %s3, 512, %s44, [#allocation5], 128, 128, 8
    $region17: #{tpu_custom_call.1} parent=1 // pred_fallthru
      _
    // Predicated region
    $region18: #{tpu_custom_call.1} parent=1 // pred_check
      _
    $region19: #{tpu_custom_call.1} parent=1 // pred_check_branch
      %51 = sbr.rel (0) target = $region21
    $region20: #{tpu_custom_call.1} parent=1 // pred_region
      _
    $region21: #{tpu_custom_call.1} parent=1 // pred_fallthru
      _
    // Predicated region
    $region22: #{tpu_custom_call.1} parent=1 // pred_check
      _
    $region23: #{tpu_custom_call.1} parent=1 // pred_check_branch
      %53 = sbr.rel (0) target = $region25
    $region24: #{tpu_custom_call.1} parent=1 // pred_region
      %54 = dma.done [#allocation3], 256
    $region25: #{tpu_custom_call.1} parent=1 // pred_fallthru
      _
    // Predicated region
    $region26: #{tpu_custom_call.1} parent=1 // pred_check
      _
    $region27: #{tpu_custom_call.1} parent=1 // pred_check_branch
      %56 = sbr.rel (0) target = $region29
    $region28: #{tpu_custom_call.1} parent=1 // pred_region
      %57 = dma.done [#allocation5], 256
    $region29: #{tpu_custom_call.1} parent=1 // pred_fallthru
      _
    // Predicated region
    $region30: #{tpu_custom_call.1} parent=1 // pred_check
      _
    $region31: #{tpu_custom_call.1} parent=1 // pred_check_branch
      %59 = sbr.rel (0) target = $region33
    $region32: #{tpu_custom_call.1} parent=1 // pred_region
      %60 = dma.done [#allocation5], 512
    $region33: #{tpu_custom_call.1} parent=1 // pred_fallthru
      _
    %v61 = vld [vmem:[#allocation2] sm:$0xff]
    %v62 = vld [vmem:[#allocation2 + $0x8] sm:$0xff]
    %v63 = vld [vmem:[#allocation4] sm:$0xff]
    %v64 = vld [vmem:[#allocation4 + $0x8] sm:$0xff]
    %v65 = vld [vmem:[%s2] sm:$0x1]
    %v67 = vlaneseq
    %v68 = vshrl.u32 %v67, 7
    %v69 = vsub.s32 0, %v68
    %v70 = vrot.slane %v65, %v69
    %vm72 = vcmask 130048
    %v74 = vsel %vm72, %v61, 0
    %v77 = vsel %vm72, %v62, 0
    %79 = vmatprep.subr.mxu0 0.0
    %80 = vmatpush1.msra.mxu0 0.0
    %81 = vmatprep.subr.mxu0 0.0
    %82 = vmatpush1.msra.mxu0 0.0
    %83 = vmatprep.subr.mxu0 0.0
    %84 = vmatpush1.msra.mxu0 0.0
    %85 = vmatprep.subr.mxu0 0.0
    %86 = vmatpush1.msra.mxu0 0.0
    %87 = vmatprep.subr.mxu0 0.0
    %88 = vmatpush1.msra.mxu0 0.0
    %89 = vmatprep.subr.mxu0 0.0
    %90 = vmatpush1.msra.mxu0 0.0
    %91 = vmatprep.subr.mxu0 0.0
    %92 = vmatpush1.msra.mxu0 0.0
    %93 = vmatprep.subr.mxu0 0.0
    %94 = vmatpush1.msra.mxu0 0.0
    %95 = vmatprep.subr.mxu0 0.0
    %96 = vmatpush1.msra.mxu0 0.0
    %97 = vmatprep.subr.mxu0 0.0
    %98 = vmatpush1.msra.mxu0 0.0
    %99 = vmatprep.subr.mxu0 0.0
    %100 = vmatpush1.msra.mxu0 0.0
    %101 = vmatprep.subr.mxu0 0.0
    %102 = vmatpush1.msra.mxu0 0.0
    %103 = vmatprep.subr.mxu0 0.0
    %104 = vmatpush1.msra.mxu0 0.0
    %105 = vmatprep.subr.mxu0 0.0
    %106 = vmatpush1.msra.mxu0 0.0
    %107 = vmatprep.subr.mxu0 0.0
    %108 = vmatpush1.msra.mxu0 %v64
    %109 = vmatprep.subr.mxu0 0.0
    %110 = vmatpush1.msra.mxu0 %v63
    %111 = vmatprep.subr.mxu0 0.0
    %112 = vmatpush2.msra.mxu0 0.0
    %113 = vmatprep.subr.mxu0 0.0
    %114 = vmatpush2.msra.mxu0 0.0
    %115 = vmatprep.subr.mxu0 0.0
    %116 = vmatpush2.msra.mxu0 0.0
    %117 = vmatprep.subr.mxu0 0.0
    %118 = vmatpush2.msra.mxu0 0.0
    %119 = vmatprep.subr.mxu0 0.0
    %120 = vmatpush2.msra.mxu0 0.0
    %121 = vmatprep.subr.mxu0 0.0
    %122 = vmatpush2.msra.mxu0 0.0
    %123 = vmatprep.subr.mxu0 0.0
    %124 = vmatpush2.msra.mxu0 0.0
    %125 = vmatprep.subr.mxu0 0.0
    %126 = vmatpush2.msra.mxu0 0.0
    %127 = vmatprep.subr.mxu0 0.0
    %128 = vmatpush2.msra.mxu0 0.0
    %129 = vmatprep.subr.mxu0 0.0
    %130 = vmatpush2.msra.mxu0 0.0
    %131 = vmatprep.subr.mxu0 0.0
    %132 = vmatpush2.msra.mxu0 0.0
    %133 = vmatprep.subr.mxu0 0.0
    %134 = vmatpush2.msra.mxu0 0.0
    %135 = vmatprep.subr.mxu0 0.0
    %136 = vmatpush2.msra.mxu0 0.0
    %137 = vmatprep.subr.mxu0 0.0
    %138 = vmatpush2.msra.mxu0 0.0
    %139 = vmatprep.subr.mxu0 0.0
    %140 = vmatpush2.msra.mxu0 0.0
    %141 = vmatprep.subr.mxu0 0.0
    %142 = vmatpush2.msra.mxu0 0.0
    %143 = vmatprep.mubr.f32.mxu0 0.0
    %144 = vmatmul.mubr.f32.gmra.mxu0 %v74
    %v145 = vpop.f32.mrf.mxu0
    %v146 = vadd.f32 %v70, %v145
    %v147 = vpop.f32.mrf.mxu0
    %148 = vmatprep.mubr.f32.mxu0 0.0
    %149 = vmatmul.mubr.f32.gmra.mxu0 %v77
    %v150 = vpop.f32.mrf.mxu0
    %v151 = vadd.f32 %v70, %v150
    %v152 = vpop.f32.mrf.mxu0
    %153 = vdwg.mxu0
    %v154 = vmax.f32 %v146, 0.0
    %v155 = vmax.f32 %v151, 0.0
    %vm156 = vcmask 261120
    %v157 = vsel %vm156, %v154, 0.0
    %158 = vadd.xlane.f32.xlu0 %v157
    %v159 = vpop.xlane.xlu0 %158
    %v160 = vsel %vm156, %v155, 0.0
    %161 = vadd.xlane.f32.xlu0 %v160
    %v162 = vpop.xlane.xlu0 %161
    %v163 = vrcp.pop 32.0
    %v164 = vmul.f32 %v159, %v163
    %v165 = vmul.f32 %v162, %v163
    %v166 = vmul.f32 %v154, %v154
    %v167 = vmul.f32 %v155, %v155
    %v168 = vsel %vm156, %v166, 0.0
    %169 = vadd.xlane.f32.xlu0 %v168
    %v170 = vpop.xlane.xlu0 %169
    %v171 = vsel %vm156, %v167, 0.0
    %172 = vadd.xlane.f32.xlu0 %v171
    %v173 = vpop.xlane.xlu0 %172
    %v174 = vmul.f32 %v170, %v163
    %v175 = vmul.f32 %v173, %v163
    %v176 = vmul.f32 %v164, %v164
    %v177 = vmul.f32 %v165, %v165
    %v178 = vsub.f32 %v174, %v176
    %v179 = vsub.f32 %v175, %v177
    %v180 = vmax.f32 %v178, 0.0
    %v181 = vmax.f32 %v179, 0.0
    %v182 = vsub.f32 %v154, %v164
    %v183 = vsub.f32 %v155, %v165
    %v184 = vadd.f32 %v180, 1e-05
    %v185 = vadd.f32 %v181, 1e-05
    %v186 = vrsqrt.pop %v184
    %v187 = vrsqrt.pop %v185
    %v188 = vmul.f32 %v182, %v186
    %v189 = vmul.f32 %v183, %v187
    %v190 = vld [vmem:[#allocation6] sm:$0xff]
    %v191 = vld [vmem:[#allocation6 + $0x8] sm:$0xff]
    %v192 = vld [vmem:[#allocation6 + $0x10] sm:$0xff]
    %v193 = vld [vmem:[#allocation6 + $0x18] sm:$0xff]
    %v194 = vld [vmem:[%s4] sm:$0x1]
    %v195 = vlaneseq
    %v196 = vshrl.u32 %v195, 7
    %v197 = vsub.s32 0, %v196
    %v198 = vrot.slane %v194, %v197
    %v200 = vsel %vm156, %v188, 0
    %v203 = vsel %vm156, %v189, 0
    %205 = vmatprep.subr.mxu0 0.0
    %206 = vmatpush1.msra.mxu0 0.0
    %207 = vmatprep.subr.mxu0 0.0
    %208 = vmatpush1.msra.mxu0 0.0
    %209 = vmatprep.subr.mxu0 0.0
    %210 = vmatpush1.msra.mxu0 0.0
    %211 = vmatprep.subr.mxu0 0.0
    %212 = vmatpush1.msra.mxu0 0.0
    %213 = vmatprep.subr.mxu0 0.0
    %214 = vmatpush1.msra.mxu0 0.0
    %215 = vmatprep.subr.mxu0 0.0
    %216 = vmatpush1.msra.mxu0 0.0
    %217 = vmatprep.subr.mxu0 0.0
    %218 = vmatpush1.msra.mxu0 0.0
    %219 = vmatprep.subr.mxu0 0.0
    %220 = vmatpush1.msra.mxu0 0.0
    %221 = vmatprep.subr.mxu0 0.0
    %222 = vmatpush1.msra.mxu0 0.0
    %223 = vmatprep.subr.mxu0 0.0
    %224 = vmatpush1.msra.mxu0 0.0
    %225 = vmatprep.subr.mxu0 0.0
    %226 = vmatpush1.msra.mxu0 0.0
    %227 = vmatprep.subr.mxu0 0.0
    %228 = vmatpush1.msra.mxu0 0.0
    %229 = vmatprep.subr.mxu0 0.0
    %230 = vmatpush1.msra.mxu0 %v193
    %231 = vmatprep.subr.mxu0 0.0
    %232 = vmatpush1.msra.mxu0 %v192
    %233 = vmatprep.subr.mxu0 0.0
    %234 = vmatpush1.msra.mxu0 %v191
    %235 = vmatprep.subr.mxu0 0.0
    %236 = vmatpush1.msra.mxu0 %v190
    %237 = vmatprep.subr.mxu0 0.0
    %238 = vmatpush2.msra.mxu0 0.0
    %239 = vmatprep.subr.mxu0 0.0
    %240 = vmatpush2.msra.mxu0 0.0
    %241 = vmatprep.subr.mxu0 0.0
    %242 = vmatpush2.msra.mxu0 0.0
    %243 = vmatprep.subr.mxu0 0.0
    %244 = vmatpush2.msra.mxu0 0.0
    %245 = vmatprep.subr.mxu0 0.0
    %246 = vmatpush2.msra.mxu0 0.0
    %247 = vmatprep.subr.mxu0 0.0
    %248 = vmatpush2.msra.mxu0 0.0
    %249 = vmatprep.subr.mxu0 0.0
    %250 = vmatpush2.msra.mxu0 0.0
    %251 = vmatprep.subr.mxu0 0.0
    %252 = vmatpush2.msra.mxu0 0.0
    %253 = vmatprep.subr.mxu0 0.0
    %254 = vmatpush2.msra.mxu0 0.0
    %255 = vmatprep.subr.mxu0 0.0
    %256 = vmatpush2.msra.mxu0 0.0
    %257 = vmatprep.subr.mxu0 0.0
    %258 = vmatpush2.msra.mxu0 0.0
    %259 = vmatprep.subr.mxu0 0.0
    %260 = vmatpush2.msra.mxu0 0.0
    %261 = vmatprep.subr.mxu0 0.0
    %262 = vmatpush2.msra.mxu0 0.0
    %263 = vmatprep.subr.mxu0 0.0
    %264 = vmatpush2.msra.mxu0 0.0
    %265 = vmatprep.subr.mxu0 0.0
    %266 = vmatpush2.msra.mxu0 0.0
    %267 = vmatprep.subr.mxu0 0.0
    %268 = vmatpush2.msra.mxu0 0.0
    %269 = vmatprep.mubr.f32.mxu0 0.0
    %270 = vmatmul.mubr.f32.gmra.mxu0 %v200
    %v271 = vpop.f32.mrf.mxu0
    %v272 = vadd.f32 %v198, %v271
    %v273 = vpop.f32.mrf.mxu0
    %274 = vmatprep.mubr.f32.mxu0 0.0
    %275 = vmatmul.mubr.f32.gmra.mxu0 %v203
    %v276 = vpop.f32.mrf.mxu0
    %v277 = vadd.f32 %v198, %v276
    %v278 = vpop.f32.mrf.mxu0
    %279 = vdwg.mxu0
    %v280 = vmax.f32 %v272, 0.0
    %v281 = vmax.f32 %v277, 0.0
    %v282 = vsel %vm156, %v280, 0.0
    %283 = vadd.xlane.f32.xlu0 %v282
    %v284 = vpop.xlane.xlu0 %283
    %v285 = vsel %vm156, %v281, 0.0
    %286 = vadd.xlane.f32.xlu0 %v285
    %v287 = vpop.xlane.xlu0 %286
    %v288 = vmul.f32 %v284, %v163
    %v289 = vmul.f32 %v287, %v163
    %v290 = vmul.f32 %v280, %v280
    %v291 = vmul.f32 %v281, %v281
    %v292 = vsel %vm156, %v290, 0.0
    %293 = vadd.xlane.f32.xlu0 %v292
    %v294 = vpop.xlane.xlu0 %293
    %v295 = vsel %vm156, %v291, 0.0
    %296 = vadd.xlane.f32.xlu0 %v295
    %v297 = vpop.xlane.xlu0 %296
    %v298 = vmul.f32 %v294, %v163
    %v299 = vmul.f32 %v297, %v163
    %v300 = vmul.f32 %v288, %v288
    %v301 = vmul.f32 %v289, %v289
    %v302 = vsub.f32 %v298, %v300
    %v303 = vsub.f32 %v299, %v301
    %v304 = vmax.f32 %v302, 0.0
    %v305 = vmax.f32 %v303, 0.0
    %v306 = vadd.f32 %v304, 1e-05
    %v307 = vadd.f32 %v305, 1e-05
    %v308 = vrsqrt.pop %v306
    %v309 = vrsqrt.pop %v307
    %v310 = vld [vmem:[%s4 + $0x1] sm:$0x1]
    %v311 = vlaneseq
    %v312 = vshrl.u32 %v311, 7
    %v313 = vsub.s32 0, %v312
    %v314 = vrot.slane %v310, %v313
    %v315 = vmul.f32 %v280, %v314
    %v316 = vmul.f32 %v281, %v314
    %v317 = vsel %vm156, %v315, 0.0
    %318 = vadd.xlane.f32.xlu0 %v317
    %v319 = vpop.xlane.xlu0 %318
    %v320 = vsel %vm156, %v316, 0.0
    %321 = vadd.xlane.f32.xlu0 %v320
    %v322 = vpop.xlane.xlu0 %321
    %v323 = vld [vmem:[%s4 + $0x2] sm:$0x1]
    %v324 = vlaneseq
    %v325 = vshrl.u32 %v324, 7
    %v326 = vsub.s32 0, %v325
    %v327 = vrot.slane %v323, %v326
    %v328 = vmul.f32 %v288, %v327
    %v329 = vmul.f32 %v289, %v327
    %v330 = vsub.f32 %v319, %v328
    %v331 = vsub.f32 %v322, %v329
    %v332 = vmul.f32 %v308, %v330
    %v333 = vmul.f32 %v309, %v331
    %335 = vrot.lane.b32.xlu0 %v327, 1
    %v336 = vpop.permute.xlu0 %335
    %v338 = vadd.f32 %v332, %v336
    %v339 = vadd.f32 %v333, %v336
    %342 = vrot.lane.b32.xlu0 %v338, 127
    %v343 = vpop.permute.xlu0 %342
    %344 = vrot.lane.b32.xlu0 %v339, 127
    %v345 = vpop.permute.xlu0 %344
    %vm348 = vcmask 7168
    %349 = vst.msk [vmem:[%s5] sm:$0xff] %vm348, %v343
    %350 = vst.msk [vmem:[%s5 + $0x8] sm:$0xff] %vm348, %v345
    // Predicated region
    $region34: #{tpu_custom_call.1} parent=1 // pred_check
      _
    $region35: #{tpu_custom_call.1} parent=1 // pred_check_branch
      %352 = sbr.rel (0) target = $region37
    $region36: #{tpu_custom_call.1} parent=1 // pred_region
      _
    $region37: #{tpu_custom_call.1} parent=1 // pred_fallthru
      _
    // Predicated region
    $region38: #{tpu_custom_call.1} parent=1 // pred_check
      _
    $region39: #{tpu_custom_call.1} parent=1 // pred_check_branch
      %354 = sbr.rel (0) target = $region41
    $region40: #{tpu_custom_call.1} parent=1 // pred_region
      _
    $region41: #{tpu_custom_call.1} parent=1 // pred_fallthru
      _
    %355 = vsyncpa [#allocation3], 1
    %356 = vsyncpa [#allocation5], 1

</llo_original>
